<compile_context>
chip_gen: v6e
topology: v6e:2x2x1
jax: 0.10.0
libtpu: 0.0.40
codegen_flags: <defaults>
</compile_context>

<pallas_src>
import math

import jax
import jax.numpy as jnp
from jax.experimental import pallas as pl
from jax.experimental.pallas import tpu as pltpu


def _gelu_tanh(x):
    # GELU(approximate='tanh'): 0.5*x*(1 + tanh(sqrt(2/pi)*(x + 0.044715*x^3)))
    c = math.sqrt(2.0 / math.pi)
    return 0.5 * x * (1.0 + jnp.tanh(c * (x + 0.044715 * x * x * x)))


def _round_up(x, m):
    return (x + m - 1) // m * m


# ------------------------------------------------------------------ kernels

def mlp_kernel_resident(x_ref, wfc_ref, bfc_ref, wproj_ref, bproj_ref, o_ref):
    # x_ref:     (tm, C)  f32 token tile (cast to bf16 at the MXU boundary)
    # wfc_ref:   (C, H)   bf16 full c_fc weight   (VMEM-resident, constant idx)
    # bfc_ref:   (1, H)   f32 c_fc bias
    # wproj_ref: (H, C)   bf16 full c_proj weight (VMEM-resident, constant idx)
    # bproj_ref: (1, C)   f32 c_proj bias
    # o_ref:     (tm, C)  output tile
    xb = x_ref[...].astype(jnp.bfloat16)
    h = jnp.dot(xb, wfc_ref[...], preferred_element_type=jnp.float32)
    g = _gelu_tanh(h + bfc_ref[...])                      # f32 GELU (EUP tanh)
    y = jnp.dot(g.astype(jnp.bfloat16), wproj_ref[...],
                preferred_element_type=jnp.float32)
    o_ref[...] = (y + bproj_ref[...]).astype(o_ref.dtype)


def mlp_kernel_tiled(x_ref, wfc_ref, bfc_ref, wproj_ref, bproj_ref, o_ref,
                     acc_ref):
    # Hidden-dim (k) reduction variant: acc_ref is a (tm, C) f32 accumulator.
    k = pl.program_id(1)

    @pl.when(k == 0)
    def _init():
        acc_ref[...] = jnp.zeros_like(acc_ref)

    xb = x_ref[...].astype(jnp.bfloat16)
    h = jnp.dot(xb, wfc_ref[...], preferred_element_type=jnp.float32)
    g = _gelu_tanh(h + bfc_ref[...])
    acc_ref[...] += jnp.dot(g.astype(jnp.bfloat16), wproj_ref[...],
                            preferred_element_type=jnp.float32)

    @pl.when(k == pl.num_programs(1) - 1)
    def _finalize():
        o_ref[...] = (acc_ref[...] + bproj_ref[...]).astype(o_ref.dtype)


# ------------------------------------------------------------------ wrapper

def prepare_mlp_params(w_fc, b_fc, w_proj, b_proj):
    """One-time parameter prep (do this at load time, NOT per forward call):
    casts weights to bf16 and reshapes biases to (1, ·) f32."""
    C, H = w_fc.shape
    assert w_proj.shape == (H, C) and b_fc.shape == (H,) and b_proj.shape == (C,)
    return (w_fc.astype(jnp.bfloat16),
            b_fc.reshape(1, H).astype(jnp.float32),
            w_proj.astype(jnp.bfloat16),
            b_proj.reshape(1, C).astype(jnp.float32))


def _vmem_limit_bytes():
    """Scoped VMEM limit that is safe on every generation: half of physical,
    capped at 64 MiB (v5e/v6e: 128 MiB phys -> 64 MiB; v7x: 64 MiB/TC -> 32 MiB)."""
    try:
        phys = int(pltpu.get_tpu_info().vmem_capacity_bytes)
    except Exception:
        phys = 128 << 20
    return min(64 << 20, max(32 << 20, phys // 2))


def mlp_forward(x, wfc_bf, bfc, wproj_bf, bproj, *, out_dtype=None,
                tm_max=1024, th=512, force_tiled=False):
    """x: (B, T, C). Weights pre-cast via prepare_mlp_params: wfc_bf (C, H) bf16,
    wproj_bf (H, C) bf16 (transposed vs. PyTorch storage), bfc (1, H) f32,
    bproj (1, C) f32. Returns (B, T, C) in out_dtype (default: x.dtype; pass
    jnp.bfloat16 to halve the output writeback when the consumer accepts it)."""
    B, T, C = x.shape
    H = wfc_bf.shape[1]
    assert wfc_bf.shape == (C, H) and wproj_bf.shape == (H, C)
    assert bfc.shape == (1, H) and bproj.shape == (1, C)
    assert C % 128 == 0 and H % 128 == 0
    if out_dtype is None:
        out_dtype = x.dtype

    M = B * T
    vmem_limit = _vmem_limit_bytes()
    budget = (vmem_limit * 3) // 4                 # leave compiler headroom

    weight_bytes = 2 * 2 * C * H                   # both weights, bf16
    resident = (not force_tiled) and weight_bytes <= budget // 2
    if not resident and H % th != 0:
        th = 128                                   # H = 4*C, C%128==0 => divides

    # --- token tile: minimise tail-padding waste, then shrink to fit VMEM ---
    x_bytes = jnp.dtype(x.dtype).itemsize
    o_bytes = jnp.dtype(out_dtype).itemsize
    Mp16 = _round_up(M, 16)
    if Mp16 <= tm_max:
        tm = Mp16                                  # single M tile, zero waste
    else:
        tm, best_pad = tm_max, None
        lo = max(16, (tm_max // 2) // 16 * 16)
        for cand in range(tm_max, lo - 1, -16):    # pick tile with least padding
            pad = _round_up(M, cand) - M
            if best_pad is None or pad < best_pad:
                tm, best_pad = cand, pad
            if pad == 0:
                break

    def footprint(t):
        buf = 2 * t * C * (x_bytes + o_bytes)          # double-buffered x / out
        if resident:
            return buf + weight_bytes + 2 * t * H * 4  # + weights + f32 h, g
        w = 3 * 2 * (C * th + th * C)                  # Buffered(3) bf16 slices
        return buf + w + 2 * t * th * 4 + t * C * 4    # + f32 h, g + accumulator

    while footprint(tm) > budget and tm > 16:
        tm = max(16, _round_up(tm // 2, 16))

    Mp = _round_up(M, tm)
    x_flat = x.reshape(M, C)
    if Mp != M:
        x_flat = jnp.pad(x_flat, ((0, Mp - M), (0, 0)))

    out_shape = jax.ShapeDtypeStruct((Mp, C), out_dtype)
    cparams = pltpu.CompilerParams(
        dimension_semantics=(("parallel",) if resident
                             else ("parallel", "arbitrary")),
        vmem_limit_bytes=vmem_limit)

    if resident:
        out_flat = pl.pallas_call(
            mlp_kernel_resident,
            out_shape=out_shape,
            grid_spec=pltpu.PrefetchScalarGridSpec(
                num_scalar_prefetch=0,
                grid=(Mp // tm,),
                in_specs=[
                    pl.BlockSpec((tm, C), lambda i: (i, 0)),   # x tile
                    pl.BlockSpec((C, H), lambda i: (0, 0)),    # w_fc (resident)
                    pl.BlockSpec((1, H), lambda i: (0, 0)),    # b_fc
                    pl.BlockSpec((H, C), lambda i: (0, 0)),    # w_proj (resident)
                    pl.BlockSpec((1, C), lambda i: (0, 0)),    # b_proj
                ],
                out_specs=pl.BlockSpec((tm, C), lambda i: (i, 0)),
            ),
            compiler_params=cparams,
        )(x_flat, wfc_bf, bfc, wproj_bf, bproj)
    else:
        out_flat = pl.pallas_call(
            mlp_kernel_tiled,
            out_shape=out_shape,
            grid_spec=pltpu.PrefetchScalarGridSpec(
                num_scalar_prefetch=0,
                grid=(Mp // tm, H // th),
                in_specs=[
                    pl.BlockSpec((tm, C), lambda i, k: (i, 0)),   # x (k-invariant)
                    pl.BlockSpec((C, th), lambda i, k: (0, k),    # w_fc slice
                                 pipeline_mode=pl.Buffered(3)),
                    pl.BlockSpec((1, th), lambda i, k: (0, k)),   # b_fc slice
                    pl.BlockSpec((th, C), lambda i, k: (k, 0),    # w_proj slice
                                 pipeline_mode=pl.Buffered(3)),
                    pl.BlockSpec((1, C), lambda i, k: (0, 0)),    # b_proj
                ],
                out_specs=pl.BlockSpec((tm, C), lambda i, k: (i, 0)),
                scratch_shapes=[pltpu.VMEM((tm, C), jnp.float32)],
            ),
            compiler_params=cparams,
        )(x_flat, wfc_bf, bfc, wproj_bf, bproj)

    if Mp != M:
        out_flat = out_flat[:M]
    return out_flat.reshape(B, T, C)


# --------------------------------------------------------------------- main

if __name__ == "__main__":
    key = jax.random.PRNGKey(0)
    kx, kw, kb1, kb2, kx2 = jax.random.split(key, 5)

    # GPT config from the spec: n_embed = 128 -> hidden = 512.
    C = 128
    H = 4 * C

    # nn.Linear weights stored transposed as (in, out); c_proj weight init = 1.
    w_fc = jax.random.normal(kw, (C, H), dtype=jnp.float32) * 0.02
    b_fc = jax.random.normal(kb1, (H,), dtype=jnp.float32) * 0.02
    w_proj = jnp.ones((H, C), dtype=jnp.float32)
    b_proj = jax.random.normal(kb2, (C,), dtype=jnp.float32) * 0.02

    params = prepare_mlp_params(w_fc, b_fc, w_proj, b_proj)  # one-time bf16 cast

    def ref_mlp(xr):
        Br, Tr, _ = xr.shape
        y = _gelu_tanh(xr.reshape(-1, C) @ w_fc + b_fc) @ w_proj + b_proj
        return y.reshape(Br, Tr, C)

    # 1) Weight-resident path (weights << VMEM budget): grid = (M tiles,).
    x1 = jax.random.normal(kx, (2, 8, C), dtype=jnp.float32)
    out1 = jax.block_until_ready(mlp_forward(x1, *params))
    ref1 = ref_mlp(x1)
    assert out1.shape == x1.shape
    assert jnp.allclose(out1, ref1, atol=5e-2, rtol=2e-2), (
        float(jnp.max(jnp.abs(out1 - ref1))))

    # 2) Hidden-tiled (reduction) fallback path, with a ragged M to exercise
    #    tail padding + slicing.
    x2 = jax.random.normal(kx2, (2, 13, C), dtype=jnp.float32)
    out2 = jax.block_until_ready(
        mlp_forward(x2, *params, force_tiled=True, th=128))
    ref2 = ref_mlp(x2)
    assert out2.shape == x2.shape
    assert jnp.allclose(out2, ref2, atol=5e-2, rtol=2e-2), (
        float(jnp.max(jnp.abs(out2 - ref2))))

    print("KERNEL_OK")
</pallas_src>

<mosaic_0001>
module attributes {stable_mosaic.version = 11 : i64} {
  func.func @mlp_kernel_resident(%arg0: i32, %arg1: memref<16x128xf32, #tpu.memory_space<vmem>>, %arg2: memref<128x512xbf16, #tpu.memory_space<vmem>>, %arg3: memref<1x512xf32, #tpu.memory_space<vmem>>, %arg4: memref<512x128xbf16, #tpu.memory_space<vmem>>, %arg5: memref<1x128xf32, #tpu.memory_space<vmem>>, %arg6: memref<16x128xf32, #tpu.memory_space<vmem>>) attributes {dimension_semantics = [#tpu.dimension_semantics<parallel>], iteration_bounds = array<i64: 1>, scalar_prefetch = 0 : i64, scratch_operands = 0 : i64, tpu.core_type = #tpu.core_type<tc>, window_params = [{transform_indices = @transform_0, window_bounds = array<i64: 16, 128>}, {pipeline_mode = #tpu.pipeline_mode<synchronous>, transform_indices = @transform_1, window_bounds = array<i64: 128, 512>}, {pipeline_mode = #tpu.pipeline_mode<synchronous>, transform_indices = @transform_2, window_bounds = array<i64: 1, 512>}, {pipeline_mode = #tpu.pipeline_mode<synchronous>, transform_indices = @transform_3, window_bounds = array<i64: 512, 128>}, {pipeline_mode = #tpu.pipeline_mode<synchronous>, transform_indices = @transform_4, window_bounds = array<i64: 1, 128>}, {transform_indices = @transform_5, window_bounds = array<i64: 16, 128>}]} {
    %c0 = arith.constant 0 : index
    %c0_0 = arith.constant 0 : index
    %0 = vector.load %arg1[%c0, %c0_0] : memref<16x128xf32, #tpu.memory_space<vmem>>, vector<16x128xf32>
    %1 = arith.truncf %0 : vector<16x128xf32> to vector<16x128xbf16>
    %c0_1 = arith.constant 0 : index
    %c0_2 = arith.constant 0 : index
    %2 = vector.load %arg2[%c0_1, %c0_2] : memref<128x512xbf16, #tpu.memory_space<vmem>>, vector<128x512xbf16>
    %cst = arith.constant dense<0.000000e+00> : vector<16x512xf32>
    %3 = tpu.matmul %1, %2, %cst {dimension_numbers = #tpu.dot_dimension_numbers<[1], [0], [0], [1], [0, 0, 1, 1], [], []>} : vector<16x128xbf16>, vector<128x512xbf16>, vector<16x512xf32> -> vector<16x512xf32>
    %c0_3 = arith.constant 0 : index
    %c0_4 = arith.constant 0 : index
    %4 = vector.load %arg3[%c0_3, %c0_4] : memref<1x512xf32, #tpu.memory_space<vmem>>, vector<1x512xf32>
    %5 = vector.broadcast %4 : vector<1x512xf32> to vector<16x512xf32>
    %6 = arith.addf %3, %5 : vector<16x512xf32>
    %cst_5 = arith.constant 5.000000e-01 : f32
    %7 = vector.broadcast %cst_5 : f32 to vector<16x512xf32>
    %8 = arith.mulf %7, %6 : vector<16x512xf32>
    %cst_6 = arith.constant 4.471500e-02 : f32
    %9 = vector.broadcast %cst_6 : f32 to vector<16x512xf32>
    %10 = arith.mulf %9, %6 : vector<16x512xf32>
    %11 = arith.mulf %10, %6 : vector<16x512xf32>
    %12 = arith.mulf %11, %6 : vector<16x512xf32>
    %13 = arith.addf %6, %12 : vector<16x512xf32>
    %cst_7 = arith.constant 0.797884583 : f32
    %14 = vector.broadcast %cst_7 : f32 to vector<16x512xf32>
    %15 = arith.mulf %14, %13 : vector<16x512xf32>
    %16 = math.tanh %15 : vector<16x512xf32>
    %cst_8 = arith.constant 1.000000e+00 : f32
    %17 = vector.broadcast %cst_8 : f32 to vector<16x512xf32>
    %18 = arith.addf %17, %16 : vector<16x512xf32>
    %19 = arith.mulf %8, %18 : vector<16x512xf32>
    %20 = arith.truncf %19 : vector<16x512xf32> to vector<16x512xbf16>
    %c0_9 = arith.constant 0 : index
    %c0_10 = arith.constant 0 : index
    %21 = vector.load %arg4[%c0_9, %c0_10] : memref<512x128xbf16, #tpu.memory_space<vmem>>, vector<512x128xbf16>
    %cst_11 = arith.constant dense<0.000000e+00> : vector<16x128xf32>
    %22 = tpu.matmul %20, %21, %cst_11 {dimension_numbers = #tpu.dot_dimension_numbers<[1], [0], [0], [1], [0, 0, 1, 1], [], []>} : vector<16x512xbf16>, vector<512x128xbf16>, vector<16x128xf32> -> vector<16x128xf32>
    %c0_12 = arith.constant 0 : index
    %c0_13 = arith.constant 0 : index
    %23 = vector.load %arg5[%c0_12, %c0_13] : memref<1x128xf32, #tpu.memory_space<vmem>>, vector<1x128xf32>
    %24 = vector.broadcast %23 : vector<1x128xf32> to vector<16x128xf32>
    %25 = arith.addf %22, %24 : vector<16x128xf32>
    %c0_14 = arith.constant 0 : index
    %c0_15 = arith.constant 0 : index
    %26 = vector.load %arg6[%c0_14, %c0_15] : memref<16x128xf32, #tpu.memory_space<vmem>>, vector<16x128xf32>
    tpu.vector_store %arg6[%c0_14, %c0_15], %25 {strides = array<i32>} : memref<16x128xf32, #tpu.memory_space<vmem>>, vector<16x128xf32>,
    return
  }
  func.func @transform_0(%arg0: i32) -> (i32, i32) {
    %c0_i32 = arith.constant 0 : i32
    %c0_i32_0 = arith.constant 0 : i32
    return %arg0, %c0_i32 : i32, i32
  }
  func.func @transform_1(%arg0: i32) -> (i32, i32) {
    %c0_i32 = arith.constant 0 : i32
    %c0_i32_0 = arith.constant 0 : i32
    %c0_i32_1 = arith.constant 0 : i32
    return %c0_i32, %c0_i32_0 : i32, i32
  }
  func.func @transform_2(%arg0: i32) -> (i32, i32) {
    %c0_i32 = arith.constant 0 : i32
    %c0_i32_0 = arith.constant 0 : i32
    %c0_i32_1 = arith.constant 0 : i32
    return %c0_i32, %c0_i32_0 : i32, i32
  }
  func.func @transform_3(%arg0: i32) -> (i32, i32) {
    %c0_i32 = arith.constant 0 : i32
    %c0_i32_0 = arith.constant 0 : i32
    %c0_i32_1 = arith.constant 0 : i32
    return %c0_i32, %c0_i32_0 : i32, i32
  }
  func.func @transform_4(%arg0: i32) -> (i32, i32) {
    %c0_i32 = arith.constant 0 : i32
    %c0_i32_0 = arith.constant 0 : i32
    %c0_i32_1 = arith.constant 0 : i32
    return %c0_i32, %c0_i32_0 : i32, i32
  }
  func.func @transform_5(%arg0: i32) -> (i32, i32) {
    %c0_i32 = arith.constant 0 : i32
    %c0_i32_0 = arith.constant 0 : i32
    return %arg0, %c0_i32 : i32, i32
  }
}

</mosaic_0001>

<llo_original>
// kernel: tpu_custom_call.1
$region0: #{tpu_custom_call.1}
  #allocation0 [shape = 'u32[]', space=smem, size = 0x4, offset = 0x4, fixed_abs, tag = 'smem constant byte address 0x4 - core index']
  #allocation1 [shape = 'u32[144,128]{1,0:T(1,128)}', space=vmem, size = 0x12000, scoped, tag = 'internal scratch']
  %s0 = inlined_call_operand.hbm [shape: f32[16,128], index: 0, kind: input, shape index: {}]
  %s1 = inlined_call_operand.hbm [shape: bf16[128,512], index: 1, kind: input, shape index: {}]
  %s2 = inlined_call_operand.hbm [shape: f32[1,512], index: 2, kind: input, shape index: {}]
  %s3 = inlined_call_operand.hbm [shape: bf16[512,128], index: 3, kind: input, shape index: {}]
  %s4 = inlined_call_operand.vmem [shape: f32[1,128], index: 4, kind: input, shape index: {}]
  %s5 = inlined_call_operand.hbm [shape: f32[16,128], index: 5, kind: output, shape index: {}]
  %s6 = sld [smem:[#allocation0]]
  $region46: #{tpu_custom_call.1} parent=0
    _
  %s8 = ssub.s32 1, %s6
  %s9 = scalar_select 0, %s8, %s6
  $region1: #{tpu_custom_call.1} parent=0
    #allocation2 [shape = 'u8[8192]{0}', space=vmem, size = 0x2000, scoped, tag = 'input window, operand 0, single buffered']
    #allocation3 [shape = 's32[1]{0}', space=sflag, size = 0x4, scoped, tag = 'scoped memory for tpu_custom_call.1']
    #allocation4 [shape = 's32[1]{0}', space=sflag, size = 0x4, scoped, tag = 'scoped memory for tpu_custom_call.1']
    #allocation5 [shape = 'u8[131072]{0}', space=vmem, size = 0x20000, scoped, tag = 'input window, operand 1, single buffered']
    #allocation6 [shape = 's32[1]{0}', space=sflag, size = 0x4, scoped, tag = 'scoped memory for tpu_custom_call.1']
    #allocation7 [shape = 'u8[2048]{0}', space=vmem, size = 0x800, scoped, tag = 'input window, operand 2, single buffered']
    #allocation8 [shape = 'u8[131072]{0}', space=vmem, size = 0x20000, scoped, tag = 'input window, operand 3, single buffered']
    #allocation9 [shape = 's32[1]{0}', space=sflag, size = 0x4, scoped, tag = 'scoped memory for tpu_custom_call.1']
    #allocation10 [shape = 'u8[8192]{0}', space=vmem, size = 0x2000, scoped, tag = 'output window, operand 0, single buffered']
    %10 = vsyncpa [#allocation3], 0
    %11 = vsyncpa [#allocation6], 0
    %12 = vsyncpa [#allocation9], 0
    %13 = vsyncpa [#allocation4], 0
    // Predicated region
    $region2: #{tpu_custom_call.1} parent=1 // pred_check
      _
    $region3: #{tpu_custom_call.1} parent=1 // pred_check_branch
      %15 = sbr.rel (0) target = $region5
    $region4: #{tpu_custom_call.1} parent=1 // pred_region
      %s17 = ssub.s32 256, 256
      %18 = vsyncadd [#allocation3], %s17
      %s19 = sshll.u32 [#allocation2], 4
      %s20 = int_to_ptr.vmem [resolvable:$true] %s19
      %25 = dma.hbm_to_vmem [thread:$0]  %s0, 256, %s20, [#allocation3], 128, 128, 8
    $region5: #{tpu_custom_call.1} parent=1 // pred_fallthru
      _
    // Predicated region
    $region6: #{tpu_custom_call.1} parent=1 // pred_check
      _
    $region7: #{tpu_custom_call.1} parent=1 // pred_check_branch
      %27 = sbr.rel (0) target = $region9
    $region8: #{tpu_custom_call.1} parent=1 // pred_region
      %s29 = ssub.s32 4096, 4096
      %30 = vsyncadd [#allocation6], %s29
      %s31 = sshll.u32 [#allocation5], 4
      %s32 = int_to_ptr.vmem [resolvable:$true] %s31
      %37 = dma.hbm_to_vmem [thread:$0]  %s1, 4096, %s32, [#allocation6], 256, 256, 16
    $region9: #{tpu_custom_call.1} parent=1 // pred_fallthru
      _
    // Predicated region
    $region10: #{tpu_custom_call.1} parent=1 // pred_check
      _
    $region11: #{tpu_custom_call.1} parent=1 // pred_check_branch
      %39 = sbr.rel (0) target = $region13
    $region12: #{tpu_custom_call.1} parent=1 // pred_region
      %s41 = ssub.s32 64, 64
      %42 = vsyncadd [#allocation6], %s41
      %s44 = sshll.u32 [#allocation7], 4
      %s45 = int_to_ptr.vmem [resolvable:$true] %s44
      %47 = dma.hbm_to_vmem [thread:$0]  %s2, 64, %s45, [#allocation6]
    $region13: #{tpu_custom_call.1} parent=1 // pred_fallthru
      _
    // Predicated region
    $region14: #{tpu_custom_call.1} parent=1 // pred_check
      _
    $region15: #{tpu_custom_call.1} parent=1 // pred_check_branch
      %49 = sbr.rel (0) target = $region17
    $region16: #{tpu_custom_call.1} parent=1 // pred_region
      %s51 = ssub.s32 4096, 4096
      %52 = vsyncadd [#allocation9], %s51
      %s53 = sshll.u32 [#allocation8], 4
      %s54 = int_to_ptr.vmem [resolvable:$true] %s53
      %59 = dma.hbm_to_vmem [thread:$0]  %s3, 4096, %s54, [#allocation9], 64, 64, 4
    $region17: #{tpu_custom_call.1} parent=1 // pred_fallthru
      _
    // Predicated region
    $region18: #{tpu_custom_call.1} parent=1 // pred_check
      _
    $region19: #{tpu_custom_call.1} parent=1 // pred_check_branch
      %61 = sbr.rel (0) target = $region21
    $region20: #{tpu_custom_call.1} parent=1 // pred_region
      _
    $region21: #{tpu_custom_call.1} parent=1 // pred_fallthru
      _
    // Predicated region
    $region22: #{tpu_custom_call.1} parent=1 // pred_check
      _
    $region23: #{tpu_custom_call.1} parent=1 // pred_check_branch
      %63 = sbr.rel (0) target = $region25
    $region24: #{tpu_custom_call.1} parent=1 // pred_region
      %64 = dma.done [#allocation3], 256
    $region25: #{tpu_custom_call.1} parent=1 // pred_fallthru
      _
    // Predicated region
    $region26: #{tpu_custom_call.1} parent=1 // pred_check
      _
    $region27: #{tpu_custom_call.1} parent=1 // pred_check_branch
      %66 = sbr.rel (0) target = $region29
    $region28: #{tpu_custom_call.1} parent=1 // pred_region
      %67 = dma.done [#allocation6], 4096
    $region29: #{tpu_custom_call.1} parent=1 // pred_fallthru
      _
    // Predicated region
    $region30: #{tpu_custom_call.1} parent=1 // pred_check
      _
    $region31: #{tpu_custom_call.1} parent=1 // pred_check_branch
      %69 = sbr.rel (0) target = $region33
    $region32: #{tpu_custom_call.1} parent=1 // pred_region
      %70 = dma.done [#allocation6], 64
    $region33: #{tpu_custom_call.1} parent=1 // pred_fallthru
      _
    // Predicated region
    $region34: #{tpu_custom_call.1} parent=1 // pred_check
      _
    $region35: #{tpu_custom_call.1} parent=1 // pred_check_branch
      %72 = sbr.rel (0) target = $region37
    $region36: #{tpu_custom_call.1} parent=1 // pred_region
      %73 = dma.done [#allocation9], 4096
    $region37: #{tpu_custom_call.1} parent=1 // pred_fallthru
      _
    %v75 = vld [vmem:[#allocation2] sm:$0xff]
    %v76 = vld [vmem:[#allocation2 + $0x8] sm:$0xff]
    %v77 = vpack.c.bf16 %v76, %v75
    %v78 = vld [vmem:[#allocation5] sm:$0xff]
    %v79 = vld [vmem:[#allocation5 + $0x8] sm:$0xff]
    %v80 = vld [vmem:[#allocation5 + $0x10] sm:$0xff]
    %v81 = vld [vmem:[#allocation5 + $0x18] sm:$0xff]
    %v82 = vld [vmem:[#allocation5 + $0x20] sm:$0xff]
    %v83 = vld [vmem:[#allocation5 + $0x28] sm:$0xff]
    %v84 = vld [vmem:[#allocation5 + $0x30] sm:$0xff]
    %v85 = vld [vmem:[#allocation5 + $0x38] sm:$0xff]
    %v86 = vld [vmem:[#allocation5 + $0x40] sm:$0xff]
    %v87 = vld [vmem:[#allocation5 + $0x48] sm:$0xff]
    %v88 = vld [vmem:[#allocation5 + $0x50] sm:$0xff]
    %v89 = vld [vmem:[#allocation5 + $0x58] sm:$0xff]
    %v90 = vld [vmem:[#allocation5 + $0x60] sm:$0xff]
    %v91 = vld [vmem:[#allocation5 + $0x68] sm:$0xff]
    %v92 = vld [vmem:[#allocation5 + $0x70] sm:$0xff]
    %v93 = vld [vmem:[#allocation5 + $0x78] sm:$0xff]
    %v94 = vld [vmem:[#allocation5 + $0x80] sm:$0xff]
    %v95 = vld [vmem:[#allocation5 + $0x88] sm:$0xff]
    %v96 = vld [vmem:[#allocation5 + $0x90] sm:$0xff]
    %v97 = vld [vmem:[#allocation5 + $0x98] sm:$0xff]
    %v98 = vld [vmem:[#allocation5 + $0xa0] sm:$0xff]
    %v99 = vld [vmem:[#allocation5 + $0xa8] sm:$0xff]
    %v100 = vld [vmem:[#allocation5 + $0xb0] sm:$0xff]
    %v101 = vld [vmem:[#allocation5 + $0xb8] sm:$0xff]
    %v102 = vld [vmem:[#allocation5 + $0xc0] sm:$0xff]
    %v103 = vld [vmem:[#allocation5 + $0xc8] sm:$0xff]
    %v104 = vld [vmem:[#allocation5 + $0xd0] sm:$0xff]
    %v105 = vld [vmem:[#allocation5 + $0xd8] sm:$0xff]
    %v106 = vld [vmem:[#allocation5 + $0xe0] sm:$0xff]
    %v107 = vld [vmem:[#allocation5 + $0xe8] sm:$0xff]
    %v108 = vld [vmem:[#allocation5 + $0xf0] sm:$0xff]
    %v109 = vld [vmem:[#allocation5 + $0xf8] sm:$0xff]
    %v110 = vld [vmem:[#allocation7] sm:$0xf]
    %v112 = vlaneseq
    %v113 = vshrl.u32 %v112, 7
    %v114 = vsub.s32 0, %v113
    %v115 = vrot.slane %v110, %v114
    %v116 = vlaneseq
    %v117 = vshrl.u32 %v116, 7
    %v118 = vsub.s32 1, %v117
    %v119 = vrot.slane %v110, %v118
    %v120 = vlaneseq
    %v121 = vshrl.u32 %v120, 7
    %v122 = vsub.s32 2, %v121
    %v123 = vrot.slane %v110, %v122
    %v124 = vlaneseq
    %v125 = vshrl.u32 %v124, 7
    %v126 = vsub.s32 3, %v125
    %v127 = vrot.slane %v110, %v126
    %v164 = vunpack.c.l.b16 %v78
    %v165 = vunpack.c.h.b16 %v78
    %v166 = vunpack.c.l.b16 %v79
    %v167 = vunpack.c.h.b16 %v79
    %v168 = vunpack.c.l.b16 %v80
    %v169 = vunpack.c.h.b16 %v80
    %v170 = vunpack.c.l.b16 %v81
    %v171 = vunpack.c.h.b16 %v81
    %v172 = vunpack.c.l.b16 %v82
    %v173 = vunpack.c.h.b16 %v82
    %v174 = vunpack.c.l.b16 %v83
    %v175 = vunpack.c.h.b16 %v83
    %v176 = vunpack.c.l.b16 %v84
    %v177 = vunpack.c.h.b16 %v84
    %v178 = vunpack.c.l.b16 %v85
    %v179 = vunpack.c.h.b16 %v85
    %v180 = vunpack.c.l.b16 %v86
    %v181 = vunpack.c.h.b16 %v86
    %v182 = vunpack.c.l.b16 %v87
    %v183 = vunpack.c.h.b16 %v87
    %v184 = vunpack.c.l.b16 %v88
    %v185 = vunpack.c.h.b16 %v88
    %v186 = vunpack.c.l.b16 %v89
    %v187 = vunpack.c.h.b16 %v89
    %v188 = vunpack.c.l.b16 %v90
    %v189 = vunpack.c.h.b16 %v90
    %v190 = vunpack.c.l.b16 %v91
    %v191 = vunpack.c.h.b16 %v91
    %v192 = vunpack.c.l.b16 %v92
    %v193 = vunpack.c.h.b16 %v92
    %v194 = vunpack.c.l.b16 %v93
    %v195 = vunpack.c.h.b16 %v93
    %v196 = vunpack.c.l.b16 %v94
    %v197 = vunpack.c.h.b16 %v94
    %v198 = vunpack.c.l.b16 %v95
    %v199 = vunpack.c.h.b16 %v95
    %v200 = vunpack.c.l.b16 %v96
    %v201 = vunpack.c.h.b16 %v96
    %v202 = vunpack.c.l.b16 %v97
    %v203 = vunpack.c.h.b16 %v97
    %v204 = vunpack.c.l.b16 %v98
    %v205 = vunpack.c.h.b16 %v98
    %v206 = vunpack.c.l.b16 %v99
    %v207 = vunpack.c.h.b16 %v99
    %v208 = vunpack.c.l.b16 %v100
    %v209 = vunpack.c.h.b16 %v100
    %v210 = vunpack.c.l.b16 %v101
    %v211 = vunpack.c.h.b16 %v101
    %v212 = vunpack.c.l.b16 %v102
    %v213 = vunpack.c.h.b16 %v102
    %v214 = vunpack.c.l.b16 %v103
    %v215 = vunpack.c.h.b16 %v103
    %v216 = vunpack.c.l.b16 %v104
    %v217 = vunpack.c.h.b16 %v104
    %v218 = vunpack.c.l.b16 %v105
    %v219 = vunpack.c.h.b16 %v105
    %v220 = vunpack.c.l.b16 %v106
    %v221 = vunpack.c.h.b16 %v106
    %v222 = vunpack.c.l.b16 %v107
    %v223 = vunpack.c.h.b16 %v107
    %v224 = vunpack.c.l.b16 %v108
    %v225 = vunpack.c.h.b16 %v108
    %v226 = vunpack.c.l.b16 %v109
    %v227 = vunpack.c.h.b16 %v109
    %v228 = vpack.c.b16 %v168, %v164
    %v229 = vpack.c.b16 %v169, %v165
    %v230 = vpack.c.b16 %v170, %v166
    %v231 = vpack.c.b16 %v171, %v167
    %v232 = vpack.c.b16 %v176, %v172
    %v233 = vpack.c.b16 %v177, %v173
    %v234 = vpack.c.b16 %v178, %v174
    %v235 = vpack.c.b16 %v179, %v175
    %v236 = vpack.c.b16 %v184, %v180
    %v237 = vpack.c.b16 %v185, %v181
    %v238 = vpack.c.b16 %v186, %v182
    %v239 = vpack.c.b16 %v187, %v183
    %v240 = vpack.c.b16 %v192, %v188
    %v241 = vpack.c.b16 %v193, %v189
    %v242 = vpack.c.b16 %v194, %v190
    %v243 = vpack.c.b16 %v195, %v191
    %v244 = vpack.c.b16 %v200, %v196
    %v245 = vpack.c.b16 %v201, %v197
    %v246 = vpack.c.b16 %v202, %v198
    %v247 = vpack.c.b16 %v203, %v199
    %v248 = vpack.c.b16 %v208, %v204
    %v249 = vpack.c.b16 %v209, %v205
    %v250 = vpack.c.b16 %v210, %v206
    %v251 = vpack.c.b16 %v211, %v207
    %v252 = vpack.c.b16 %v216, %v212
    %v253 = vpack.c.b16 %v217, %v213
    %v254 = vpack.c.b16 %v218, %v214
    %v255 = vpack.c.b16 %v219, %v215
    %v256 = vpack.c.b16 %v224, %v220
    %v257 = vpack.c.b16 %v225, %v221
    %v258 = vpack.c.b16 %v226, %v222
    %v259 = vpack.c.b16 %v227, %v223
    %292 = vmatprep.subr.bf16.mxu0 %v257
    %293 = vmatpush1.bf16.msra.mxu0 %v256
    %294 = vmatprep.subr.bf16.mxu0 %v253
    %295 = vmatpush1.bf16.msra.mxu0 %v252
    %296 = vmatprep.subr.bf16.mxu0 %v249
    %297 = vmatpush1.bf16.msra.mxu0 %v248
    %298 = vmatprep.subr.bf16.mxu0 %v245
    %299 = vmatpush1.bf16.msra.mxu0 %v244
    %300 = vmatprep.subr.bf16.mxu0 %v241
    %301 = vmatpush1.bf16.msra.mxu0 %v240
    %302 = vmatprep.subr.bf16.mxu0 %v237
    %303 = vmatpush1.bf16.msra.mxu0 %v236
    %304 = vmatprep.subr.bf16.mxu0 %v233
    %305 = vmatpush1.bf16.msra.mxu0 %v232
    %306 = vmatprep.subr.bf16.mxu0 %v229
    %307 = vmatpush1.bf16.msra.mxu0 %v228
    %308 = vmatprep.subr.bf16.mxu0 0
    %309 = vmatpush2.bf16.msra.mxu0 0
    %310 = vmatprep.subr.bf16.mxu0 0
    %311 = vmatpush2.bf16.msra.mxu0 0
    %312 = vmatprep.subr.bf16.mxu0 0
    %313 = vmatpush2.bf16.msra.mxu0 0
    %314 = vmatprep.subr.bf16.mxu0 0
    %315 = vmatpush2.bf16.msra.mxu0 0
    %316 = vmatprep.subr.bf16.mxu0 0
    %317 = vmatpush2.bf16.msra.mxu0 0
    %318 = vmatprep.subr.bf16.mxu0 0
    %319 = vmatpush2.bf16.msra.mxu0 0
    %320 = vmatprep.subr.bf16.mxu0 0
    %321 = vmatpush2.bf16.msra.mxu0 0
    %322 = vmatprep.subr.bf16.mxu0 0
    %323 = vmatpush2.bf16.msra.mxu0 0
    %324 = vmatprep.mubr.bf16.mxu0 0
    %325 = vmatmul.mubr.bf16.gmra.mxu0 %v77
    %v326 = vpop.f32.mrf.mxu0
    %v327 = vadd.f32 %v115, %v326
    %v328 = vpop.f32.mrf.mxu0
    %v329 = vadd.f32 %v119, %v328
    %v330 = vpop.f32.mrf.mxu0
    %v331 = vadd.f32 %v115, %v330
    %v332 = vpop.f32.mrf.mxu0
    %v333 = vadd.f32 %v119, %v332
    %334 = vdwg.mxu0
    %335 = vmatprep.subr.bf16.mxu0 %v259
    %336 = vmatpush1.bf16.msra.mxu0 %v258
    %337 = vmatprep.subr.bf16.mxu0 %v255
    %338 = vmatpush1.bf16.msra.mxu0 %v254
    %339 = vmatprep.subr.bf16.mxu0 %v251
    %340 = vmatpush1.bf16.msra.mxu0 %v250
    %341 = vmatprep.subr.bf16.mxu0 %v247
    %342 = vmatpush1.bf16.msra.mxu0 %v246
    %343 = vmatprep.subr.bf16.mxu0 %v243
    %344 = vmatpush1.bf16.msra.mxu0 %v242
    %345 = vmatprep.subr.bf16.mxu0 %v239
    %346 = vmatpush1.bf16.msra.mxu0 %v238
    %347 = vmatprep.subr.bf16.mxu0 %v235
    %348 = vmatpush1.bf16.msra.mxu0 %v234
    %349 = vmatprep.subr.bf16.mxu0 %v231
    %350 = vmatpush1.bf16.msra.mxu0 %v230
    %351 = vmatprep.subr.bf16.mxu0 0
    %352 = vmatpush2.bf16.msra.mxu0 0
    %353 = vmatprep.subr.bf16.mxu0 0
    %354 = vmatpush2.bf16.msra.mxu0 0
    %355 = vmatprep.subr.bf16.mxu0 0
    %356 = vmatpush2.bf16.msra.mxu0 0
    %357 = vmatprep.subr.bf16.mxu0 0
    %358 = vmatpush2.bf16.msra.mxu0 0
    %359 = vmatprep.subr.bf16.mxu0 0
    %360 = vmatpush2.bf16.msra.mxu0 0
    %361 = vmatprep.subr.bf16.mxu0 0
    %362 = vmatpush2.bf16.msra.mxu0 0
    %363 = vmatprep.subr.bf16.mxu0 0
    %364 = vmatpush2.bf16.msra.mxu0 0
    %365 = vmatprep.subr.bf16.mxu0 0
    %366 = vmatpush2.bf16.msra.mxu0 0
    %367 = vmatprep.mubr.bf16.mxu0 0
    %368 = vmatmul.mubr.bf16.gmra.mxu0 %v77
    %v369 = vpop.f32.mrf.mxu0
    %v370 = vadd.f32 %v123, %v369
    %v371 = vpop.f32.mrf.mxu0
    %v372 = vadd.f32 %v127, %v371
    %v373 = vpop.f32.mrf.mxu0
    %v374 = vadd.f32 %v123, %v373
    %v375 = vpop.f32.mrf.mxu0
    %v376 = vadd.f32 %v127, %v375
    %377 = vdwg.mxu0
    %v378 = vmul.f32 %v327, 0.5
    %v379 = vmul.f32 %v329, 0.5
    %v380 = vmul.f32 %v370, 0.5
    %v381 = vmul.f32 %v372, 0.5
    %v382 = vmul.f32 %v331, 0.5
    %v383 = vmul.f32 %v333, 0.5
    %v384 = vmul.f32 %v374, 0.5
    %v385 = vmul.f32 %v376, 0.5
    %v386 = vmul.f32 %v327, 0.044715
    %v387 = vmul.f32 %v329, 0.044715
    %v388 = vmul.f32 %v370, 0.044715
    %v389 = vmul.f32 %v372, 0.044715
    %v390 = vmul.f32 %v331, 0.044715
    %v391 = vmul.f32 %v333, 0.044715
    %v392 = vmul.f32 %v374, 0.044715
    %v393 = vmul.f32 %v376, 0.044715
    %v394 = vmul.f32 %v386, %v327
    %v395 = vmul.f32 %v387, %v329
    %v396 = vmul.f32 %v388, %v370
    %v397 = vmul.f32 %v389, %v372
    %v398 = vmul.f32 %v390, %v331
    %v399 = vmul.f32 %v391, %v333
    %v400 = vmul.f32 %v392, %v374
    %v401 = vmul.f32 %v393, %v376
    %v402 = vmul.f32 %v394, %v327
    %v403 = vmul.f32 %v395, %v329
    %v404 = vmul.f32 %v396, %v370
    %v405 = vmul.f32 %v397, %v372
    %v406 = vmul.f32 %v398, %v331
    %v407 = vmul.f32 %v399, %v333
    %v408 = vmul.f32 %v400, %v374
    %v409 = vmul.f32 %v401, %v376
    %v410 = vadd.f32 %v327, %v402
    %v411 = vadd.f32 %v329, %v403
    %v412 = vadd.f32 %v370, %v404
    %v413 = vadd.f32 %v372, %v405
    %v414 = vadd.f32 %v331, %v406
    %v415 = vadd.f32 %v333, %v407
    %v416 = vadd.f32 %v374, %v408
    %v417 = vadd.f32 %v376, %v409
    %v418 = vmul.f32 %v410, 0.7978846
    %v419 = vmul.f32 %v411, 0.7978846
    %v420 = vmul.f32 %v412, 0.7978846
    %v421 = vmul.f32 %v413, 0.7978846
    %v422 = vmul.f32 %v414, 0.7978846
    %v423 = vmul.f32 %v415, 0.7978846
    %v424 = vmul.f32 %v416, 0.7978846
    %v425 = vmul.f32 %v417, 0.7978846
    %v426 = vtanh.pop %v418
    %v427 = vtanh.pop %v419
    %v428 = vtanh.pop %v420
    %v429 = vtanh.pop %v421
    %v430 = vtanh.pop %v422
    %v431 = vtanh.pop %v423
    %v432 = vtanh.pop %v424
    %v433 = vtanh.pop %v425
    %v434 = vadd.f32 %v426, 1.0
    %v435 = vadd.f32 %v427, 1.0
    %v436 = vadd.f32 %v428, 1.0
    %v437 = vadd.f32 %v429, 1.0
    %v438 = vadd.f32 %v430, 1.0
    %v439 = vadd.f32 %v431, 1.0
    %v440 = vadd.f32 %v432, 1.0
    %v441 = vadd.f32 %v433, 1.0
    %v442 = vmul.f32 %v378, %v434
    %v443 = vmul.f32 %v379, %v435
    %v444 = vmul.f32 %v380, %v436
    %v445 = vmul.f32 %v381, %v437
    %v446 = vmul.f32 %v382, %v438
    %v447 = vmul.f32 %v383, %v439
    %v448 = vmul.f32 %v384, %v440
    %v449 = vmul.f32 %v385, %v441
    %v450 = vpack.c.bf16 %v446, %v442
    %v451 = vpack.c.bf16 %v447, %v443
    %v452 = vpack.c.bf16 %v448, %v444
    %v453 = vpack.c.bf16 %v449, %v445
    %v454 = vld [vmem:[#allocation8] sm:$0xf]
    %v455 = vld [vmem:[#allocation8 + $0x4] sm:$0xf]
    %v456 = vld [vmem:[#allocation8 + $0x8] sm:$0xf]
    %v457 = vld [vmem:[#allocation8 + $0xc] sm:$0xf]
    %v458 = vld [vmem:[#allocation8 + $0x10] sm:$0xf]
    %v459 = vld [vmem:[#allocation8 + $0x14] sm:$0xf]
    %v460 = vld [vmem:[#allocation8 + $0x18] sm:$0xf]
    %v461 = vld [vmem:[#allocation8 + $0x1c] sm:$0xf]
    %v462 = vld [vmem:[#allocation8 + $0x20] sm:$0xf]
    %v463 = vld [vmem:[#allocation8 + $0x24] sm:$0xf]
    %v464 = vld [vmem:[#allocation8 + $0x28] sm:$0xf]
    %v465 = vld [vmem:[#allocation8 + $0x2c] sm:$0xf]
    %v466 = vld [vmem:[#allocation8 + $0x30] sm:$0xf]
    %v467 = vld [vmem:[#allocation8 + $0x34] sm:$0xf]
    %v468 = vld [vmem:[#allocation8 + $0x38] sm:$0xf]
    %v469 = vld [vmem:[#allocation8 + $0x3c] sm:$0xf]
    %v470 = vld [vmem:[#allocation8 + $0x40] sm:$0xf]
    %v471 = vld [vmem:[#allocation8 + $0x44] sm:$0xf]
    %v472 = vld [vmem:[#allocation8 + $0x48] sm:$0xf]
    %v473 = vld [vmem:[#allocation8 + $0x4c] sm:$0xf]
    %v474 = vld [vmem:[#allocation8 + $0x50] sm:$0xf]
    %v475 = vld [vmem:[#allocation8 + $0x54] sm:$0xf]
    %v476 = vld [vmem:[#allocation8 + $0x58] sm:$0xf]
    %v477 = vld [vmem:[#allocation8 + $0x5c] sm:$0xf]
    %v478 = vld [vmem:[#allocation8 + $0x60] sm:$0xf]
    %v479 = vld [vmem:[#allocation8 + $0x64] sm:$0xf]
    %v480 = vld [vmem:[#allocation8 + $0x68] sm:$0xf]
    %v481 = vld [vmem:[#allocation8 + $0x6c] sm:$0xf]
    %v482 = vld [vmem:[#allocation8 + $0x70] sm:$0xf]
    %v483 = vld [vmem:[#allocation8 + $0x74] sm:$0xf]
    %v484 = vld [vmem:[#allocation8 + $0x78] sm:$0xf]
    %v485 = vld [vmem:[#allocation8 + $0x7c] sm:$0xf]
    %v486 = vld [vmem:[#allocation8 + $0x80] sm:$0xf]
    %v487 = vld [vmem:[#allocation8 + $0x84] sm:$0xf]
    %v488 = vld [vmem:[#allocation8 + $0x88] sm:$0xf]
    %v489 = vld [vmem:[#allocation8 + $0x8c] sm:$0xf]
    %v490 = vld [vmem:[#allocation8 + $0x90] sm:$0xf]
    %v491 = vld [vmem:[#allocation8 + $0x94] sm:$0xf]
    %v492 = vld [vmem:[#allocation8 + $0x98] sm:$0xf]
    %v493 = vld [vmem:[#allocation8 + $0x9c] sm:$0xf]
    %v494 = vld [vmem:[#allocation8 + $0xa0] sm:$0xf]
    %v495 = vld [vmem:[#allocation8 + $0xa4] sm:$0xf]
    %v496 = vld [vmem:[#allocation8 + $0xa8] sm:$0xf]
    %v497 = vld [vmem:[#allocation8 + $0xac] sm:$0xf]
    %v498 = vld [vmem:[#allocation8 + $0xb0] sm:$0xf]
    %v499 = vld [vmem:[#allocation8 + $0xb4] sm:$0xf]
    %v500 = vld [vmem:[#allocation8 + $0xb8] sm:$0xf]
    %v501 = vld [vmem:[#allocation8 + $0xbc] sm:$0xf]
    %v502 = vld [vmem:[#allocation8 + $0xc0] sm:$0xf]
    %v503 = vld [vmem:[#allocation8 + $0xc4] sm:$0xf]
    %v504 = vld [vmem:[#allocation8 + $0xc8] sm:$0xf]
    %v505 = vld [vmem:[#allocation8 + $0xcc] sm:$0xf]
    %v506 = vld [vmem:[#allocation8 + $0xd0] sm:$0xf]
    %v507 = vld [vmem:[#allocation8 + $0xd4] sm:$0xf]
    %v508 = vld [vmem:[#allocation8 + $0xd8] sm:$0xf]
    %v509 = vld [vmem:[#allocation8 + $0xdc] sm:$0xf]
    %v510 = vld [vmem:[#allocation8 + $0xe0] sm:$0xf]
    %v511 = vld [vmem:[#allocation8 + $0xe4] sm:$0xf]
    %v512 = vld [vmem:[#allocation8 + $0xe8] sm:$0xf]
    %v513 = vld [vmem:[#allocation8 + $0xec] sm:$0xf]
    %v514 = vld [vmem:[#allocation8 + $0xf0] sm:$0xf]
    %v515 = vld [vmem:[#allocation8 + $0xf4] sm:$0xf]
    %v516 = vld [vmem:[#allocation8 + $0xf8] sm:$0xf]
    %v517 = vld [vmem:[#allocation8 + $0xfc] sm:$0xf]
    %v518 = vld [vmem:[%s4] sm:$0x1]
    %v520 = vlaneseq
    %v521 = vshrl.u32 %v520, 7
    %v522 = vsub.s32 0, %v521
    %v523 = vrot.slane %v518, %v522
    %v589 = vunpack.c.l.b16 %v454
    %v590 = vunpack.c.l.b16 %v455
    %v591 = vunpack.c.l.b16 %v456
    %v592 = vunpack.c.l.b16 %v457
    %v593 = vunpack.c.l.b16 %v458
    %v594 = vunpack.c.l.b16 %v459
    %v595 = vunpack.c.l.b16 %v460
    %v596 = vunpack.c.l.b16 %v461
    %v597 = vunpack.c.l.b16 %v462
    %v598 = vunpack.c.l.b16 %v463
    %v599 = vunpack.c.l.b16 %v464
    %v600 = vunpack.c.l.b16 %v465
    %v601 = vunpack.c.l.b16 %v466
    %v602 = vunpack.c.l.b16 %v467
    %v603 = vunpack.c.l.b16 %v468
    %v604 = vunpack.c.l.b16 %v469
    %v605 = vunpack.c.l.b16 %v470
    %v606 = vunpack.c.l.b16 %v471
    %v607 = vunpack.c.l.b16 %v472
    %v608 = vunpack.c.l.b16 %v473
    %v609 = vunpack.c.l.b16 %v474
    %v610 = vunpack.c.l.b16 %v475
    %v611 = vunpack.c.l.b16 %v476
    %v612 = vunpack.c.l.b16 %v477
    %v613 = vunpack.c.l.b16 %v478
    %v614 = vunpack.c.l.b16 %v479
    %v615 = vunpack.c.l.b16 %v480
    %v616 = vunpack.c.l.b16 %v481
    %v617 = vunpack.c.l.b16 %v482
    %v618 = vunpack.c.l.b16 %v483
    %v619 = vunpack.c.l.b16 %v484
    %v620 = vunpack.c.l.b16 %v485
    %v621 = vunpack.c.l.b16 %v486
    %v622 = vunpack.c.l.b16 %v487
    %v623 = vunpack.c.l.b16 %v488
    %v624 = vunpack.c.l.b16 %v489
    %v625 = vunpack.c.l.b16 %v490
    %v626 = vunpack.c.l.b16 %v491
    %v627 = vunpack.c.l.b16 %v492
    %v628 = vunpack.c.l.b16 %v493
    %v629 = vunpack.c.l.b16 %v494
    %v630 = vunpack.c.l.b16 %v495
    %v631 = vunpack.c.l.b16 %v496
    %v632 = vunpack.c.l.b16 %v497
    %v633 = vunpack.c.l.b16 %v498
    %v634 = vunpack.c.l.b16 %v499
    %v635 = vunpack.c.l.b16 %v500
    %v636 = vunpack.c.l.b16 %v501
    %v637 = vunpack.c.l.b16 %v502
    %v638 = vunpack.c.l.b16 %v503
    %v639 = vunpack.c.l.b16 %v504
    %v640 = vunpack.c.l.b16 %v505
    %v641 = vunpack.c.l.b16 %v506
    %v642 = vunpack.c.l.b16 %v507
    %v643 = vunpack.c.l.b16 %v508
    %v644 = vunpack.c.l.b16 %v509
    %v645 = vunpack.c.l.b16 %v510
    %v646 = vunpack.c.l.b16 %v511
    %v647 = vunpack.c.l.b16 %v512
    %v648 = vunpack.c.l.b16 %v513
    %v649 = vunpack.c.l.b16 %v514
    %v650 = vunpack.c.l.b16 %v515
    %v651 = vunpack.c.l.b16 %v516
    %v652 = vunpack.c.l.b16 %v517
    %v653 = vpack.c.b16 %v590, %v589
    %v654 = vpack.c.b16 %v592, %v591
    %v655 = vpack.c.b16 %v594, %v593
    %v656 = vpack.c.b16 %v596, %v595
    %v657 = vpack.c.b16 %v598, %v597
    %v658 = vpack.c.b16 %v600, %v599
    %v659 = vpack.c.b16 %v602, %v601
    %v660 = vpack.c.b16 %v604, %v603
    %v661 = vpack.c.b16 %v606, %v605
    %v662 = vpack.c.b16 %v608, %v607
    %v663 = vpack.c.b16 %v610, %v609
    %v664 = vpack.c.b16 %v612, %v611
    %v665 = vpack.c.b16 %v614, %v613
    %v666 = vpack.c.b16 %v616, %v615
    %v667 = vpack.c.b16 %v618, %v617
    %v668 = vpack.c.b16 %v620, %v619
    %v669 = vpack.c.b16 %v622, %v621
    %v670 = vpack.c.b16 %v624, %v623
    %v671 = vpack.c.b16 %v626, %v625
    %v672 = vpack.c.b16 %v628, %v627
    %v673 = vpack.c.b16 %v630, %v629
    %v674 = vpack.c.b16 %v632, %v631
    %v675 = vpack.c.b16 %v634, %v633
    %v676 = vpack.c.b16 %v636, %v635
    %v677 = vpack.c.b16 %v638, %v637
    %v678 = vpack.c.b16 %v640, %v639
    %v679 = vpack.c.b16 %v642, %v641
    %v680 = vpack.c.b16 %v644, %v643
    %v681 = vpack.c.b16 %v646, %v645
    %v682 = vpack.c.b16 %v648, %v647
    %v683 = vpack.c.b16 %v650, %v649
    %v684 = vpack.c.b16 %v652, %v651
    %717 = vmatprep.subr.bf16.mxu0 0
    %718 = vmatpush1.bf16.msra.mxu0 %v660
    %719 = vmatprep.subr.bf16.mxu0 0
    %720 = vmatpush1.bf16.msra.mxu0 %v659
    %721 = vmatprep.subr.bf16.mxu0 0
    %722 = vmatpush1.bf16.msra.mxu0 %v658
    %723 = vmatprep.subr.bf16.mxu0 0
    %724 = vmatpush1.bf16.msra.mxu0 %v657
    %725 = vmatprep.subr.bf16.mxu0 0
    %726 = vmatpush1.bf16.msra.mxu0 %v656
    %727 = vmatprep.subr.bf16.mxu0 0
    %728 = vmatpush1.bf16.msra.mxu0 %v655
    %729 = vmatprep.subr.bf16.mxu0 0
    %730 = vmatpush1.bf16.msra.mxu0 %v654
    %731 = vmatprep.subr.bf16.mxu0 0
    %732 = vmatpush1.bf16.msra.mxu0 %v653
    %733 = vmatprep.subr.bf16.mxu0 0
    %734 = vmatpush2.bf16.msra.mxu0 %v668
    %735 = vmatprep.subr.bf16.mxu0 0
    %736 = vmatpush2.bf16.msra.mxu0 %v667
    %737 = vmatprep.subr.bf16.mxu0 0
    %738 = vmatpush2.bf16.msra.mxu0 %v666
    %739 = vmatprep.subr.bf16.mxu0 0
    %740 = vmatpush2.bf16.msra.mxu0 %v665
    %741 = vmatprep.subr.bf16.mxu0 0
    %742 = vmatpush2.bf16.msra.mxu0 %v664
    %743 = vmatprep.subr.bf16.mxu0 0
    %744 = vmatpush2.bf16.msra.mxu0 %v663
    %745 = vmatprep.subr.bf16.mxu0 0
    %746 = vmatpush2.bf16.msra.mxu0 %v662
    %747 = vmatprep.subr.bf16.mxu0 0
    %748 = vmatpush2.bf16.msra.mxu0 %v661
    %749 = vmatprep.mubr.bf16.mxu0 %v451
    %750 = vmatmul.mubr.bf16.gmra.mxu0 %v450
    %v751 = vpop.f32.mrf.mxu0
    %v752 = vadd.f32 %v523, %v751
    %v753 = vpop.f32.mrf.mxu0
    %v754 = vpop.f32.mrf.mxu0
    %v755 = vadd.f32 %v523, %v754
    %v756 = vpop.f32.mrf.mxu0
    %757 = vdwg.mxu0
    %758 = vmatprep.subr.bf16.mxu0 0
    %759 = vmatpush1.bf16.msra.mxu0 %v676
    %760 = vmatprep.subr.bf16.mxu0 0
    %761 = vmatpush1.bf16.msra.mxu0 %v675
    %762 = vmatprep.subr.bf16.mxu0 0
    %763 = vmatpush1.bf16.msra.mxu0 %v674
    %764 = vmatprep.subr.bf16.mxu0 0
    %765 = vmatpush1.bf16.msra.mxu0 %v673
    %766 = vmatprep.subr.bf16.mxu0 0
    %767 = vmatpush1.bf16.msra.mxu0 %v672
    %768 = vmatprep.subr.bf16.mxu0 0
    %769 = vmatpush1.bf16.msra.mxu0 %v671
    %770 = vmatprep.subr.bf16.mxu0 0
    %771 = vmatpush1.bf16.msra.mxu0 %v670
    %772 = vmatprep.subr.bf16.mxu0 0
    %773 = vmatpush1.bf16.msra.mxu0 %v669
    %774 = vmatprep.subr.bf16.mxu0 0
    %775 = vmatpush2.bf16.msra.mxu0 %v684
    %776 = vmatprep.subr.bf16.mxu0 0
    %777 = vmatpush2.bf16.msra.mxu0 %v683
    %778 = vmatprep.subr.bf16.mxu0 0
    %779 = vmatpush2.bf16.msra.mxu0 %v682
    %780 = vmatprep.subr.bf16.mxu0 0
    %781 = vmatpush2.bf16.msra.mxu0 %v681
    %782 = vmatprep.subr.bf16.mxu0 0
    %783 = vmatpush2.bf16.msra.mxu0 %v680
    %784 = vmatprep.subr.bf16.mxu0 0
    %785 = vmatpush2.bf16.msra.mxu0 %v679
    %786 = vmatprep.subr.bf16.mxu0 0
    %787 = vmatpush2.bf16.msra.mxu0 %v678
    %788 = vmatprep.subr.bf16.mxu0 0
    %789 = vmatpush2.bf16.msra.mxu0 %v677
    %790 = vmatprep.mubr.bf16.mxu0 %v453
    %791 = vmatmul.mubr.bf16.gmra.mxu0 %v452
    %v792 = vpop.f32.mrf.mxu0
    %v793 = vadd.f32 %v752, %v792
    %v794 = vpop.f32.mrf.mxu0
    %v795 = vpop.f32.mrf.mxu0
    %v796 = vadd.f32 %v755, %v795
    %v797 = vpop.f32.mrf.mxu0
    %798 = vdwg.mxu0
    %799 = vst [vmem:[#allocation10] sm:$0xff] %v793
    %800 = vst [vmem:[#allocation10 + $0x8] sm:$0xff] %v796
    // Predicated region
    $region38: #{tpu_custom_call.1} parent=1 // pred_check
      _
    $region39: #{tpu_custom_call.1} parent=1 // pred_check_branch
      %802 = sbr.rel (0) target = $region41
    $region40: #{tpu_custom_call.1} parent=1 // pred_region
      %s804 = ssub.s32 256, 256
      %805 = vsyncadd [#allocation4], %s804
      %s806 = sshll.u32 [#allocation10], 4
      %s807 = int_to_ptr.vmem [resolvable:$true] %s806
      %812 = dma.vmem_to_hbm [thread:$0]  %s807, 256, %s5, [#allocation4], 128, 128, 8
    $region41: #{tpu_custom_call.1} parent=1 // pred_fallthru
      _
    // Predicated region
    $region42: #{tpu_custom_call.1} parent=1 // pred_check
      _
    $region43: #{tpu_custom_call.1} parent=1 // pred_check_branch
      %814 = sbr.rel (0) target = $region45
    $region44: #{tpu_custom_call.1} parent=1 // pred_region
      %815 = dma.done [#allocation4], 256
    $region45: #{tpu_custom_call.1} parent=1 // pred_fallthru
      _
    %816 = vsyncpa [#allocation3], 1
    %817 = vsyncpa [#allocation6], 1
    %818 = vsyncpa [#allocation9], 1
    %819 = vsyncpa [#allocation4], 1

</llo_original>
